<compile_context>
chip_gen: v6e
topology: v6e:2x2x1
jax: 0.10.0
libtpu: 0.0.40
codegen_flags: <defaults>
</compile_context>

<pallas_src>
import functools

import jax
import jax.numpy as jnp
from jax import lax
from jax.experimental import pallas as pl
from jax.experimental.pallas import tpu as pltpu

LANES = 128
SUBLANES = 8
# ~2 MiB per input block: 2 inputs x 2 buffers x 2 MiB = 8 MiB VMEM footprint,
# comfortably under the scoped-VMEM defaults on v5e (16 MiB), v6e and v7x.
TARGET_BLOCK_BYTES = 2 * 1024 * 1024


def _rmse_partial_kernel(yhat_ref, y_ref, out_ref, acc_ref, *,
                         tile_rows, tiles_per_split, rows, needs_mask):
    i = pl.program_id(1)  # sequential reduction axis (last grid axis)

    @pl.when(i == 0)
    def _():
        acc_ref[...] = jnp.zeros_like(acc_ref)

    d = yhat_ref[...].astype(jnp.float32) - y_ref[...].astype(jnp.float32)

    if needs_mask:
        # The last block may hang over the end of the array and read
        # unspecified values: mask rows past the true row count.
        t = pl.program_id(0) * tiles_per_split + i
        row_ids = t * tile_rows + lax.broadcasted_iota(
            jnp.int32, (tile_rows, LANES), 0)
        d = jnp.where(row_ids < rows, d, 0.0)

    dd = d * d
    # Fold the block into (8,128) vreg-shaped partial sums: elementwise VPU
    # adds only; the expensive cross-lane reduction is deferred to the wrapper.
    acc_ref[...] += jnp.sum(
        dd.reshape(tile_rows // SUBLANES, SUBLANES, LANES), axis=0)

    @pl.when(i == tiles_per_split - 1)
    def _():
        out_ref[...] = acc_ref[...]


def rmse_loss(yhat, y):
    """sqrt(mean((yhat - y)^2)), i.e. torch.sqrt(nn.MSELoss()(yhat, y))."""
    assert yhat.shape == y.shape, "yhat and y must have the same shape"
    n_true = int(yhat.size)
    itemsize = jnp.dtype(yhat.dtype).itemsize

    yhat_f = jnp.ravel(yhat)
    y_f = jnp.ravel(y)

    # Pad only to (8,128) granularity; zero pads are exact since (0-0)^2 == 0
    # and we divide by the true element count below.
    n_pad = (-n_true) % (SUBLANES * LANES)
    if n_pad:
        yhat_f = jnp.pad(yhat_f, (0, n_pad))
        y_f = jnp.pad(y_f, (0, n_pad))

    rows = yhat_f.size // LANES  # always a multiple of 8
    yhat2d = yhat_f.reshape(rows, LANES)
    y2d = y_f.reshape(rows, LANES)

    # Large lane-dense block, capped at the whole array: tiny inputs become a
    # single block (no pipeline machinery / per-step overhead).
    tile_rows = TARGET_BLOCK_BYTES // (LANES * itemsize)
    tile_rows = max(SUBLANES, (min(tile_rows, rows) // SUBLANES) * SUBLANES)

    tiles_total = int(pl.cdiv(rows, tile_rows))
    # Leading "parallel" axis -> work shards across the 2 TensorCores on v7x.
    n_splits = 2 if (tiles_total >= 4 and tiles_total % 2 == 0) else 1
    tiles_per_split = tiles_total // n_splits
    needs_mask = tiles_total * tile_rows != rows

    kernel = functools.partial(
        _rmse_partial_kernel,
        tile_rows=tile_rows,
        tiles_per_split=tiles_per_split,
        rows=rows,
        needs_mask=needs_mask,
    )

    def in_map(c, i):
        return (c * tiles_per_split + i, 0)

    partials = pl.pallas_call(
        kernel,
        out_shape=jax.ShapeDtypeStruct((n_splits * SUBLANES, LANES),
                                       jnp.float32),
        grid_spec=pltpu.PrefetchScalarGridSpec(
            num_scalar_prefetch=0,
            grid=(n_splits, tiles_per_split),
            in_specs=[
                pl.BlockSpec((tile_rows, LANES), in_map),
                pl.BlockSpec((tile_rows, LANES), in_map),
            ],
            out_specs=pl.BlockSpec((SUBLANES, LANES), lambda c, i: (c, 0)),
            scratch_shapes=[pltpu.VMEM((SUBLANES, LANES), jnp.float32)],
        ),
        compiler_params=pltpu.CompilerParams(
            dimension_semantics=("parallel", "arbitrary"),
        ),
    )(yhat2d, y2d)

    # Single tiny cross-lane reduce + divide + sqrt on (n_splits*8, 128) f32.
    return jnp.sqrt(jnp.sum(partials) / jnp.float32(n_true))


if __name__ == "__main__":
    key = jax.random.PRNGKey(0)
    k1, k2 = jax.random.split(key)
    # Small NCHW-shaped prediction/target pair: batch=2, channels=4, 16x16.
    yhat = jax.random.normal(k1, (2, 4, 16, 16), dtype=jnp.float32)
    y = jax.random.normal(k2, (2, 4, 16, 16), dtype=jnp.float32)

    loss = rmse_loss(yhat, y)
    jax.block_until_ready(loss)

    # Reference check (same math as torch.sqrt(nn.MSELoss()(yhat, y))).
    ref = jnp.sqrt(jnp.mean((yhat - y) ** 2))
    assert jnp.allclose(loss, ref, rtol=1e-5, atol=1e-6), (loss, ref)

    print("KERNEL_OK")
</pallas_src>

<mosaic_0001>
module attributes {stable_mosaic.version = 11 : i64} {
  func.func @_rmse_partial_kernel(%arg0: i32, %arg1: i32, %arg2: memref<16x128xf32, #tpu.memory_space<vmem>>, %arg3: memref<16x128xf32, #tpu.memory_space<vmem>>, %arg4: memref<8x128xf32, #tpu.memory_space<vmem>>, %arg5: memref<8x128xf32, #tpu.memory_space<vmem>>) attributes {dimension_semantics = [#tpu.dimension_semantics<parallel>, #tpu.dimension_semantics<arbitrary>], iteration_bounds = array<i64: 1, 1>, scalar_prefetch = 0 : i64, scratch_operands = 1 : i64, tpu.core_type = #tpu.core_type<tc>, window_params = [{transform_indices = @transform_0, window_bounds = array<i64: 16, 128>}, {transform_indices = @transform_1, window_bounds = array<i64: 16, 128>}, {transform_indices = @transform_2, window_bounds = array<i64: 8, 128>}]} {
    %c0_i32 = arith.constant 0 : i32
    %0 = arith.cmpi eq, %arg1, %c0_i32 : i32
    %1 = arith.extui %0 : i1 to i32
    %c0_i32_0 = arith.constant 0 : i32
    %2 = arith.cmpi ne, %1, %c0_i32_0 : i32
    scf.if %2 {
      %cst_10 = arith.constant 0.000000e+00 : f32
      %15 = vector.broadcast %cst_10 : f32 to vector<8x128xf32>
      %c0_11 = arith.constant 0 : index
      %c0_12 = arith.constant 0 : index
      %16 = vector.load %arg5[%c0_11, %c0_12] : memref<8x128xf32, #tpu.memory_space<vmem>>, vector<8x128xf32>
      tpu.vector_store %arg5[%c0_11, %c0_12], %15 {strides = array<i32>} : memref<8x128xf32, #tpu.memory_space<vmem>>, vector<8x128xf32>,
    } else {
    }
    %c0 = arith.constant 0 : index
    %c0_1 = arith.constant 0 : index
    %3 = vector.load %arg2[%c0, %c0_1] : memref<16x128xf32, #tpu.memory_space<vmem>>, vector<16x128xf32>
    %c0_2 = arith.constant 0 : index
    %c0_3 = arith.constant 0 : index
    %4 = vector.load %arg3[%c0_2, %c0_3] : memref<16x128xf32, #tpu.memory_space<vmem>>, vector<16x128xf32>
    %5 = arith.subf %3, %4 : vector<16x128xf32>
    %6 = arith.mulf %5, %5 : vector<16x128xf32>
    %c0_4 = arith.constant 0 : index
    %c0_5 = arith.constant 0 : index
    %7 = vector.load %arg5[%c0_4, %c0_5] : memref<8x128xf32, #tpu.memory_space<vmem>>, vector<8x128xf32>
    %8 = vector.shape_cast %6 : vector<16x128xf32> to vector<2x8x128xf32>
    %cst = arith.constant dense<0.000000e+00> : vector<8x128xf32>
    %9 = vector.multi_reduction <add>, %8, %cst [0] : vector<2x8x128xf32> to vector<8x128xf32>
    %10 = arith.addf %7, %9 : vector<8x128xf32>
    %c0_6 = arith.constant 0 : index
    %c0_7 = arith.constant 0 : index
    %11 = vector.load %arg5[%c0_6, %c0_7] : memref<8x128xf32, #tpu.memory_space<vmem>>, vector<8x128xf32>
    tpu.vector_store %arg5[%c0_6, %c0_7], %10 {strides = array<i32>} : memref<8x128xf32, #tpu.memory_space<vmem>>, vector<8x128xf32>,
    %c0_i32_8 = arith.constant 0 : i32
    %12 = arith.cmpi eq, %arg1, %c0_i32_8 : i32
    %13 = arith.extui %12 : i1 to i32
    %c0_i32_9 = arith.constant 0 : i32
    %14 = arith.cmpi ne, %13, %c0_i32_9 : i32
    scf.if %14 {
      %c0_10 = arith.constant 0 : index
      %c0_11 = arith.constant 0 : index
      %15 = vector.load %arg5[%c0_10, %c0_11] : memref<8x128xf32, #tpu.memory_space<vmem>>, vector<8x128xf32>
      %c0_12 = arith.constant 0 : index
      %c0_13 = arith.constant 0 : index
      %16 = vector.load %arg4[%c0_12, %c0_13] : memref<8x128xf32, #tpu.memory_space<vmem>>, vector<8x128xf32>
      tpu.vector_store %arg4[%c0_12, %c0_13], %15 {strides = array<i32>} : memref<8x128xf32, #tpu.memory_space<vmem>>, vector<8x128xf32>,
    } else {
    }
    return
  }
  func.func @transform_0(%arg0: i32, %arg1: i32) -> (i32, i32) {
    %c1_i32 = arith.constant 1 : i32
    %0 = arith.muli %arg0, %c1_i32 : i32
    %1 = arith.addi %0, %arg1 : i32
    %c0_i32 = arith.constant 0 : i32
    %c0_i32_0 = arith.constant 0 : i32
    return %1, %c0_i32 : i32, i32
  }
  func.func @transform_1(%arg0: i32, %arg1: i32) -> (i32, i32) {
    %c1_i32 = arith.constant 1 : i32
    %0 = arith.muli %arg0, %c1_i32 : i32
    %1 = arith.addi %0, %arg1 : i32
    %c0_i32 = arith.constant 0 : i32
    %c0_i32_0 = arith.constant 0 : i32
    return %1, %c0_i32 : i32, i32
  }
  func.func @transform_2(%arg0: i32, %arg1: i32) -> (i32, i32) {
    %c0_i32 = arith.constant 0 : i32
    %c0_i32_0 = arith.constant 0 : i32
    return %arg0, %c0_i32 : i32, i32
  }
}

</mosaic_0001>

<llo_original>
// kernel: tpu_custom_call.1
$region0: #{tpu_custom_call.1}
  #allocation0 [shape = 'u32[]', space=smem, size = 0x4, offset = 0x4, fixed_abs, tag = 'smem constant byte address 0x4 - core index']
  #allocation1 [shape = 'u32[144,128]{1,0:T(1,128)}', space=vmem, size = 0x12000, scoped, tag = 'internal scratch']
  #allocation2 [shape = 'f32[8,128]{1,0:T(8,128)}', space=vmem, size = 0x1000, scoped, tag = 'scratch operand']
  %s0 = inlined_call_operand.hbm [shape: f32[16,128], index: 0, kind: input, shape index: {}]
  %s1 = inlined_call_operand.hbm [shape: f32[16,128], index: 1, kind: input, shape index: {}]
  %s2 = inlined_call_operand.hbm [shape: f32[8,128], index: 2, kind: output, shape index: {}]
  %s3 = sld [smem:[#allocation0]]
  $region34: #{tpu_custom_call.1} parent=0
    _
  %s5 = ssub.s32 1, %s3
  %s6 = scalar_select 0, %s5, %s3
  $region1: #{tpu_custom_call.1} parent=0
    #allocation3 [shape = 'u8[8192]{0}', space=vmem, size = 0x2000, scoped, tag = 'input window, operand 0, single buffered']
    #allocation4 [shape = 's32[1]{0}', space=sflag, size = 0x4, scoped, tag = 'scoped memory for tpu_custom_call.1']
    #allocation5 [shape = 's32[1]{0}', space=sflag, size = 0x4, scoped, tag = 'scoped memory for tpu_custom_call.1']
    #allocation6 [shape = 'u8[8192]{0}', space=vmem, size = 0x2000, scoped, tag = 'input window, operand 1, single buffered']
    #allocation7 [shape = 's32[1]{0}', space=sflag, size = 0x4, scoped, tag = 'scoped memory for tpu_custom_call.1']
    #allocation8 [shape = 'u8[4096]{0}', space=vmem, size = 0x1000, scoped, tag = 'output window, operand 0, single buffered']
    %7 = vsyncpa [#allocation4], 0
    %8 = vsyncpa [#allocation7], 0
    %9 = vsyncpa [#allocation5], 0
    // Predicated region
    $region2: #{tpu_custom_call.1} parent=1 // pred_check
      _
    $region3: #{tpu_custom_call.1} parent=1 // pred_check_branch
      %11 = sbr.rel (0) target = $region5
    $region4: #{tpu_custom_call.1} parent=1 // pred_region
      %s12 = sadd.s32 0, 0
      %s13 = smul.u32 2, %s12
      %s15 = ssub.s32 256, 256
      %16 = vsyncadd [#allocation4], %s15
      %s17 = smul.addr %s13, 128
      %s18 = scalar_lea.hbm %s0, %s17
      %s19 = sshll.u32 [#allocation3], 4
      %s20 = int_to_ptr.vmem [resolvable:$true] %s19
      %25 = dma.hbm_to_vmem [thread:$0]  %s18, 256, %s20, [#allocation4], 128, 128, 8
    $region5: #{tpu_custom_call.1} parent=1 // pred_fallthru
      _
    // Predicated region
    $region6: #{tpu_custom_call.1} parent=1 // pred_check
      _
    $region7: #{tpu_custom_call.1} parent=1 // pred_check_branch
      %27 = sbr.rel (0) target = $region9
    $region8: #{tpu_custom_call.1} parent=1 // pred_region
      %s28 = sadd.s32 0, 0
      %s29 = smul.u32 2, %s28
      %s31 = ssub.s32 256, 256
      %32 = vsyncadd [#allocation7], %s31
      %s33 = smul.addr %s29, 128
      %s34 = scalar_lea.hbm %s1, %s33
      %s35 = sshll.u32 [#allocation6], 4
      %s36 = int_to_ptr.vmem [resolvable:$true] %s35
      %41 = dma.hbm_to_vmem [thread:$0]  %s34, 256, %s36, [#allocation7], 128, 128, 8
    $region9: #{tpu_custom_call.1} parent=1 // pred_fallthru
      _
    // Predicated region
    $region10: #{tpu_custom_call.1} parent=1 // pred_check
      _
    $region11: #{tpu_custom_call.1} parent=1 // pred_check_branch
      %43 = sbr.rel (0) target = $region13
    $region12: #{tpu_custom_call.1} parent=1 // pred_region
      %44 = dma.done [#allocation4], 256
    $region13: #{tpu_custom_call.1} parent=1 // pred_fallthru
      _
    // Predicated region
    $region14: #{tpu_custom_call.1} parent=1 // pred_check
      _
    $region15: #{tpu_custom_call.1} parent=1 // pred_check_branch
      %46 = sbr.rel (0) target = $region17
    $region16: #{tpu_custom_call.1} parent=1 // pred_region
      %47 = dma.done [#allocation7], 256
    $region17: #{tpu_custom_call.1} parent=1 // pred_fallthru
      _
    %s48 = sadd.s32 0, 0
    %s49 = smul.u32 2, %s48
    %s50 = sadd.s32 0, 0
    %s51 = smul.u32 2, %s50
    %p52 = scmp.eq.s32.totalorder 0, 0
    // Predicated region
    $region18: #{tpu_custom_call.1} parent=1 // pred_check
      %p53 = pneg %p52
    $region19: #{tpu_custom_call.1} parent=1 // pred_check_branch
      %55 = sbr.rel (%p53) target = $region21
    $region20: #{tpu_custom_call.1} parent=1 // pred_region
      %56 = vst [vmem:[#allocation2] sm:$0xff] 0.0
    $region21: #{tpu_custom_call.1} parent=1 // pred_fallthru
      _
    %v57 = vld [vmem:[#allocation3] sm:$0xff]
    %v58 = vld [vmem:[#allocation3 + $0x8] sm:$0xff]
    %v59 = vld [vmem:[#allocation6] sm:$0xff]
    %v60 = vld [vmem:[#allocation6 + $0x8] sm:$0xff]
    %v61 = vsub.f32 %v57, %v59
    %v62 = vsub.f32 %v58, %v60
    %v63 = vmul.f32 %v61, %v61
    %v64 = vmul.f32 %v62, %v62
    %v65 = vld [vmem:[#allocation2] sm:$0xff]
    %v66 = vadd.f32 %v63, %v64
    %v67 = vadd.f32 %v65, %v66
    %68 = vst [vmem:[#allocation2] sm:$0xff] %v67
    // Predicated region
    $region22: #{tpu_custom_call.1} parent=1 // pred_check
      %p69 = pneg %p52
    $region23: #{tpu_custom_call.1} parent=1 // pred_check_branch
      %71 = sbr.rel (%p69) target = $region25
    $region24: #{tpu_custom_call.1} parent=1 // pred_region
      %v72 = vld [vmem:[#allocation2] sm:$0xff]
      %73 = vst [vmem:[#allocation8] sm:$0xff] %v72
    $region25: #{tpu_custom_call.1} parent=1 // pred_fallthru
      _
    // Predicated region
    $region26: #{tpu_custom_call.1} parent=1 // pred_check
      _
    $region27: #{tpu_custom_call.1} parent=1 // pred_check_branch
      %75 = sbr.rel (0) target = $region29
    $region28: #{tpu_custom_call.1} parent=1 // pred_region
      %s77 = ssub.s32 128, 128
      %78 = vsyncadd [#allocation5], %s77
      %s80 = sshll.u32 [#allocation8], 4
      %s81 = int_to_ptr.vmem [resolvable:$true] %s80
      %83 = dma.vmem_to_hbm [thread:$0]  %s81, 128, %s2, [#allocation5]
    $region29: #{tpu_custom_call.1} parent=1 // pred_fallthru
      _
    // Predicated region
    $region30: #{tpu_custom_call.1} parent=1 // pred_check
      _
    $region31: #{tpu_custom_call.1} parent=1 // pred_check_branch
      %85 = sbr.rel (0) target = $region33
    $region32: #{tpu_custom_call.1} parent=1 // pred_region
      %86 = dma.done [#allocation5], 128
    $region33: #{tpu_custom_call.1} parent=1 // pred_fallthru
      _
    %87 = vsyncpa [#allocation4], 1
    %88 = vsyncpa [#allocation7], 1
    %89 = vsyncpa [#allocation5], 1

</llo_original>
